<compile_context>
chip_gen: v6e
topology: v6e:2x2x1
jax: 0.10.0
libtpu: 0.0.40
codegen_flags: <defaults>
</compile_context>

<pallas_src>
import functools

import jax
import jax.numpy as jnp
from jax.experimental import pallas as pl
from jax.experimental.pallas import tpu as pltpu


def _round_up(x: int, m: int) -> int:
    return ((x + m - 1) // m) * m


def _pow2_block(x: int) -> int:
    """Largest power-of-two multiple of 128 that is <= x (clamped to [128, 1024])."""
    x = max(128, min(int(x), 1024))
    b = 128
    while b * 2 <= x:
        b *= 2
    return b


def _default_vmem_limit() -> int:
    cap = 64 * 1024 * 1024
    try:
        cap = int(getattr(pltpu.get_tpu_info(), "vmem_capacity_bytes", cap))
    except Exception:
        cap = 64 * 1024 * 1024
    # ~75% of physical VMEM: ~48 MiB on v7x (64 MiB), ~96 MiB on v5e/v6e (128 MiB).
    return max(32 * 1024 * 1024, min(int(cap * 0.75), 112 * 1024 * 1024))


def _vmem_estimate(tm: int, tn: int, d_pad: int, n_pad: int, isz: int) -> int:
    feat = 2 * d_pad * (tm + tn) * isz        # double-buffered feature tiles
    meta_cols = 2 * 2 * n_pad * 128 * 4       # resident (n_pad,1) columns (lane-padded)
    meta_rows = 2 * 2 * 8 * tm * 4            # (1,tm) rows (sublane-padded)
    temps = 4 * tm * tn * 4                   # gram / half / masked f32 temporaries
    out_and_scratch = 4 * 8 * tm * 4
    return feat + meta_cols + meta_rows + temps + out_and_scratch


def _triplet_hinge_kernel(xa_ref, xc_ref, sqa_ref, sqc_ref, ta_ref, tc_ref,
                          out_ref, ap_ref, an_ref, *, margin, tn):
    """One (anchor-block i, candidate-block j) grid step.

    xa_ref : (d_pad, tm) anchor features (pre-transposed; resident across j)
    xc_ref : (tn, d_pad) candidate features (streamed over j)
    sqa_ref: (1, tm)     anchor ||x||^2
    sqc_ref: (n_pad, 1)  candidate 0.5*||x||^2 (padded rows = huge finite sentinel;
                         VMEM-resident, sliced by j)
    ta_ref : (1, tm)     anchor labels
    tc_ref : (n_pad, 1)  candidate labels (padded rows = min(label)-1; resident)
    out_ref: (1, tm)     per-anchor hinge, written once at the last j
    ap_ref / an_ref: (1, tm) scratch: running max / min of 0.5*||c||^2 - <c,a>
    """
    j = pl.program_id(1)

    @pl.when(j == 0)
    def _init():
        ap_ref[...] = jnp.full_like(ap_ref, -jnp.inf)
        an_ref[...] = jnp.full_like(an_ref, jnp.inf)

    # Gram tile on the MXU: (tn, d) x (d, tm), f32 accumulation.
    gram = jnp.dot(xc_ref[...], xa_ref[...],
                   preferred_element_type=jnp.float32)             # (tn, tm) f32

    off = pl.multiple_of(j * tn, tn)
    sqc_half = sqc_ref[pl.ds(off, tn), :]                           # (tn, 1) f32
    tc = tc_ref[pl.ds(off, tn), :]                                  # (tn, 1) i32

    # d2(c,a) = 2*half + ||a||^2 with half = 0.5*||c||^2 - <c,a>; half is monotone
    # in d2 per anchor, so mine on `half` and defer the constant + sqrt to finalize.
    half = sqc_half - gram                                          # (tn, tm)
    same = tc == ta_ref[...]                                        # (tn, tm)

    ap_ref[...] = jnp.maximum(
        ap_ref[...],
        jnp.max(jnp.where(same, half, -jnp.inf), axis=0, keepdims=True))
    an_ref[...] = jnp.minimum(
        an_ref[...],
        jnp.min(jnp.where(same, jnp.inf, half), axis=0, keepdims=True))

    @pl.when(j == pl.num_programs(1) - 1)
    def _finalize():
        eps = jnp.float32(1e-12)        # matches torch .clamp(min=1e-12).sqrt()
        sqa = sqa_ref[...]
        d2_ap = jnp.maximum(2.0 * ap_ref[...] + sqa, eps)
        d2_an = jnp.maximum(2.0 * an_ref[...] + sqa, eps)
        out_ref[...] = jnp.maximum(
            jnp.sqrt(d2_ap) - jnp.sqrt(d2_an) + jnp.float32(margin), 0.0)


def triplet_loss(inputs, targets, margin=1.0, *,
                 block_anchor=512, block_cand=256, vmem_limit_bytes=None):
    """inputs: (n, d) float; targets: (n,) int labels. Returns scalar f32 loss."""
    n, d = inputs.shape
    isz = jnp.dtype(inputs.dtype).itemsize
    d_pad = _round_up(d, 128)
    n_up = _round_up(n, 128)

    vmem_limit = _default_vmem_limit() if vmem_limit_bytes is None else int(vmem_limit_bytes)
    budget = int(vmem_limit * 0.85)

    # Anchors on lanes, candidates on sublanes; power-of-two x 128 tiles so any
    # mix of tm/tn divides the padded batch.
    tm = _pow2_block(min(block_anchor, n_up))
    tn = _pow2_block(min(block_cand, n_up))

    def _est(tm_, tn_):
        return _vmem_estimate(tm_, tn_, d_pad, _round_up(n, max(tm_, tn_)), isz)

    # Fit the VMEM budget: shrink the streamed candidate tile first (keeps the
    # arithmetic intensity ~ 2*tm/itemsize), then the anchor tile.
    while tn > 128 and _est(tm, tn) > budget:
        tn //= 2
    while tm > 128 and _est(tm, tn) > budget:
        tm //= 2
    # Keep >= 2 anchor blocks so the "parallel" axis can shard across v7x's 2 TCs.
    while tm > 128 and _round_up(n, max(tm, tn)) // tm < 2:
        tm //= 2

    n_pad = _round_up(n, max(tm, tn))
    assert n_pad % tm == 0 and n_pad % tn == 0, "block sizes must divide padded n"

    # Zero-pad features (does not change norms or the gram).
    x_p = jnp.zeros((n_pad, d_pad), inputs.dtype).at[:n, :d].set(inputs)
    x_t = x_p.T                                    # (d_pad, n_pad): anchors on lanes

    valid = jnp.arange(n_pad) < n
    t32 = targets.astype(jnp.int32)
    pad_label = jnp.min(t32) - jnp.int32(1)        # never equal to any real label
    t_full = jnp.zeros((n_pad,), jnp.int32).at[:n].set(t32)
    t_p = jnp.where(valid, t_full, pad_label)

    # Squared norms precomputed once (O(n*d)). Candidate role carries 0.5*||x||^2
    # with a huge *finite* sentinel on padded rows (they lose every neg-min and,
    # thanks to pad_label, can never be positives).
    sq = jnp.sum(jnp.square(x_p.astype(jnp.float32)), axis=1)        # (n_pad,)
    sq_row = sq.reshape(1, n_pad)                                     # anchor ||x||^2
    big = jnp.float32(1e30)
    sq_half_col = jnp.where(valid, 0.5 * sq, big).reshape(n_pad, 1)   # candidate 0.5*||x||^2
    t_row = t_p.reshape(1, n_pad)
    t_col = t_p.reshape(n_pad, 1)

    grid_i = n_pad // tm       # anchor blocks (parallel)
    grid_j = n_pad // tn       # candidate blocks (reduction, innermost)

    cost = pl.CostEstimate(
        flops=2 * n_pad * n_pad * d_pad + 6 * n_pad * n_pad,
        transcendentals=2 * n_pad,
        bytes_accessed=(grid_i + 1) * n_pad * d_pad * isz + 24 * n_pad,
    )

    kernel = functools.partial(_triplet_hinge_kernel, margin=float(margin), tn=tn)

    hinge = pl.pallas_call(
        kernel,
        out_shape=jax.ShapeDtypeStruct((1, n_pad), jnp.float32),
        grid_spec=pltpu.PrefetchScalarGridSpec(
            num_scalar_prefetch=0,
            grid=(grid_i, grid_j),
            in_specs=[
                pl.BlockSpec((d_pad, tm), lambda i, j: (0, i)),    # anchor features (transposed)
                pl.BlockSpec((tn, d_pad), lambda i, j: (j, 0)),    # candidate features (streamed)
                pl.BlockSpec((1, tm), lambda i, j: (0, i)),        # anchor ||x||^2
                pl.BlockSpec((n_pad, 1), lambda i, j: (0, 0)),     # candidate 0.5*||x||^2 (resident)
                pl.BlockSpec((1, tm), lambda i, j: (0, i)),        # anchor labels
                pl.BlockSpec((n_pad, 1), lambda i, j: (0, 0)),     # candidate labels (resident)
            ],
            out_specs=pl.BlockSpec((1, tm), lambda i, j: (0, i)),
            scratch_shapes=[pltpu.VMEM((1, tm), jnp.float32),
                            pltpu.VMEM((1, tm), jnp.float32)],
        ),
        compiler_params=pltpu.CompilerParams(
            dimension_semantics=("parallel", "arbitrary"),
            vmem_limit_bytes=vmem_limit,
        ),
        cost_estimate=cost,
    )(x_t, x_p, sq_row, sq_half_col, t_row, t_col)

    # MarginRankingLoss(reduction='mean') over the n real anchors.
    return jnp.sum(hinge[0, :n]) / n


def _reference_triplet_loss(inputs, targets, margin=1.0):
    # Pure-JAX reference mirroring the PyTorch module (HIGHEST precision matmul
    # so the comparison is not polluted by XLA's default matmul passes).
    x = inputs.astype(jnp.float32)
    sq = jnp.sum(x * x, axis=1, keepdims=True)
    gram = jnp.dot(x, x.T, precision=jax.lax.Precision.HIGHEST)
    dist = jnp.sqrt(jnp.maximum(sq + sq.T - 2.0 * gram, 1e-12))
    mask = targets[:, None] == targets[None, :]
    dist_ap = jnp.max(jnp.where(mask, dist, -jnp.inf), axis=1)
    dist_an = jnp.min(jnp.where(mask, jnp.inf, dist), axis=1)
    return jnp.mean(jnp.maximum(dist_ap - dist_an + margin, 0.0))


if __name__ == "__main__":
    key = jax.random.PRNGKey(0)
    k1, k2, k3 = jax.random.split(key, 3)

    # Small case matching the module's (batch, feat_dim) interface.
    n, d = 8, 32
    x = jax.random.normal(k1, (n, d), dtype=jnp.float32)
    t = jnp.array([0, 0, 1, 1, 2, 2, 3, 3], dtype=jnp.int32)
    loss = triplet_loss(x, t, margin=1.0)
    jax.block_until_ready(loss)
    ref = _reference_triplet_loss(x, t, margin=1.0)
    assert jnp.allclose(loss, ref, atol=1e-5, rtol=1e-5), (loss, ref)

    # Case exercising multi-block anchors (parallel axis split), multi-step
    # candidate streaming (resident-metadata slicing at j>0) and padding.
    n2, d2 = 200, 96
    x2 = jax.random.normal(k2, (n2, d2), dtype=jnp.float32)
    t2 = jax.random.randint(k3, (n2,), 0, 16, dtype=jnp.int32)
    loss2 = triplet_loss(x2, t2, margin=0.3, block_anchor=256, block_cand=128)
    jax.block_until_ready(loss2)
    ref2 = _reference_triplet_loss(x2, t2, margin=0.3)
    assert jnp.allclose(loss2, ref2, atol=1e-4, rtol=1e-4), (loss2, ref2)

    print("KERNEL_OK")
</pallas_src>

<mosaic_0001>
module attributes {stable_mosaic.version = 11 : i64} {
  func.func @_triplet_hinge_kernel(%arg0: i32, %arg1: i32, %arg2: memref<128x128xf32, #tpu.memory_space<vmem>>, %arg3: memref<128x128xf32, #tpu.memory_space<vmem>>, %arg4: memref<1x128xf32, #tpu.memory_space<vmem>>, %arg5: memref<128x1xf32, #tpu.memory_space<vmem>>, %arg6: memref<1x128xi32, #tpu.memory_space<vmem>>, %arg7: memref<128x1xi32, #tpu.memory_space<vmem>>, %arg8: memref<1x128xf32, #tpu.memory_space<vmem>>, %arg9: memref<1x128xf32, #tpu.memory_space<vmem>>, %arg10: memref<1x128xf32, #tpu.memory_space<vmem>>) attributes {dimension_semantics = [#tpu.dimension_semantics<parallel>, #tpu.dimension_semantics<arbitrary>], iteration_bounds = array<i64: 1, 1>, scalar_prefetch = 0 : i64, scratch_operands = 2 : i64, tpu.core_type = #tpu.core_type<tc>, window_params = [{transform_indices = @transform_0, window_bounds = array<i64: 128, 128>}, {transform_indices = @transform_1, window_bounds = array<i64: 128, 128>}, {transform_indices = @transform_2, window_bounds = array<i64: 1, 128>}, {pipeline_mode = #tpu.pipeline_mode<synchronous>, transform_indices = @transform_3, window_bounds = array<i64: 128, 1>}, {transform_indices = @transform_4, window_bounds = array<i64: 1, 128>}, {pipeline_mode = #tpu.pipeline_mode<synchronous>, transform_indices = @transform_5, window_bounds = array<i64: 128, 1>}, {transform_indices = @transform_6, window_bounds = array<i64: 1, 128>}]} {
    %c0_i32 = arith.constant 0 : i32
    %0 = arith.cmpi eq, %arg1, %c0_i32 : i32
    %1 = arith.extui %0 : i1 to i32
    %c0_i32_0 = arith.constant 0 : i32
    %2 = arith.cmpi ne, %1, %c0_i32_0 : i32
    scf.if %2 {
      %cst_22 = arith.constant 0xFF800000 : f32
      %35 = vector.broadcast %cst_22 : f32 to vector<1x128xf32>
      %c0_23 = arith.constant 0 : index
      %c0_24 = arith.constant 0 : index
      %36 = vector.load %arg9[%c0_23, %c0_24] : memref<1x128xf32, #tpu.memory_space<vmem>>, vector<1x128xf32>
      tpu.vector_store %arg9[%c0_23, %c0_24], %35 {strides = array<i32>} : memref<1x128xf32, #tpu.memory_space<vmem>>, vector<1x128xf32>,
      %cst_25 = arith.constant 0x7F800000 : f32
      %37 = vector.broadcast %cst_25 : f32 to vector<1x128xf32>
      %c0_26 = arith.constant 0 : index
      %c0_27 = arith.constant 0 : index
      %38 = vector.load %arg10[%c0_26, %c0_27] : memref<1x128xf32, #tpu.memory_space<vmem>>, vector<1x128xf32>
      tpu.vector_store %arg10[%c0_26, %c0_27], %37 {strides = array<i32>} : memref<1x128xf32, #tpu.memory_space<vmem>>, vector<1x128xf32>,
    } else {
    }
    %c0 = arith.constant 0 : index
    %c0_1 = arith.constant 0 : index
    %3 = vector.load %arg3[%c0, %c0_1] : memref<128x128xf32, #tpu.memory_space<vmem>>, vector<128x128xf32>
    %c0_2 = arith.constant 0 : index
    %c0_3 = arith.constant 0 : index
    %4 = vector.load %arg2[%c0_2, %c0_3] : memref<128x128xf32, #tpu.memory_space<vmem>>, vector<128x128xf32>
    %cst = arith.constant dense<0.000000e+00> : vector<128x128xf32>
    %5 = tpu.matmul %3, %4, %cst {dimension_numbers = #tpu.dot_dimension_numbers<[1], [0], [0], [1], [0, 0, 1, 1], [], []>} : vector<128x128xf32>, vector<128x128xf32>, vector<128x128xf32> -> vector<128x128xf32>
    %c128_i32 = arith.constant 128 : i32
    %6 = arith.muli %arg1, %c128_i32 : i32
    %7 = tpu.assume_multiple %6, 128 : i32
    %8 = arith.index_cast %7 : i32 to index
    %c0_4 = arith.constant 0 : index
    %9 = vector.load %arg5[%8, %c0_4] : memref<128x1xf32, #tpu.memory_space<vmem>>, vector<128x1xf32>
    %10 = arith.index_cast %7 : i32 to index
    %c0_5 = arith.constant 0 : index
    %11 = vector.load %arg7[%10, %c0_5] : memref<128x1xi32, #tpu.memory_space<vmem>>, vector<128x1xi32>
    %12 = vector.broadcast %9 : vector<128x1xf32> to vector<128x128xf32>
    %13 = arith.subf %12, %5 : vector<128x128xf32>
    %c0_6 = arith.constant 0 : index
    %c0_7 = arith.constant 0 : index
    %14 = vector.load %arg6[%c0_6, %c0_7] : memref<1x128xi32, #tpu.memory_space<vmem>>, vector<1x128xi32>
    %15 = vector.broadcast %11 : vector<128x1xi32> to vector<128x128xi32>
    %16 = vector.broadcast %14 : vector<1x128xi32> to vector<128x128xi32>
    %17 = arith.cmpi eq, %15, %16 : vector<128x128xi32>
    %c0_8 = arith.constant 0 : index
    %c0_9 = arith.constant 0 : index
    %18 = vector.load %arg9[%c0_8, %c0_9] : memref<1x128xf32, #tpu.memory_space<vmem>>, vector<1x128xf32>
    %cst_10 = arith.constant 0xFF800000 : f32
    %19 = vector.broadcast %cst_10 : f32 to vector<128x128xf32>
    %20 = arith.select %17, %13, %19 : vector<128x128xi1>, vector<128x128xf32>
    %cst_11 = arith.constant dense<0xFF800000> : vector<128xf32>
    %21 = vector.multi_reduction <maximumf>, %20, %cst_11 [0] : vector<128x128xf32> to vector<128xf32>
    %22 = vector.shape_cast %21 : vector<128xf32> to vector<1x128xf32>
    %23 = arith.maximumf %18, %22 : vector<1x128xf32>
    %c0_12 = arith.constant 0 : index
    %c0_13 = arith.constant 0 : index
    %24 = vector.load %arg9[%c0_12, %c0_13] : memref<1x128xf32, #tpu.memory_space<vmem>>, vector<1x128xf32>
    tpu.vector_store %arg9[%c0_12, %c0_13], %23 {strides = array<i32>} : memref<1x128xf32, #tpu.memory_space<vmem>>, vector<1x128xf32>,
    %c0_14 = arith.constant 0 : index
    %c0_15 = arith.constant 0 : index
    %25 = vector.load %arg10[%c0_14, %c0_15] : memref<1x128xf32, #tpu.memory_space<vmem>>, vector<1x128xf32>
    %cst_16 = arith.constant 0x7F800000 : f32
    %26 = vector.broadcast %cst_16 : f32 to vector<128x128xf32>
    %27 = arith.select %17, %26, %13 : vector<128x128xi1>, vector<128x128xf32>
    %cst_17 = arith.constant dense<0x7F800000> : vector<128xf32>
    %28 = vector.multi_reduction <minimumf>, %27, %cst_17 [0] : vector<128x128xf32> to vector<128xf32>
    %29 = vector.shape_cast %28 : vector<128xf32> to vector<1x128xf32>
    %30 = arith.minimumf %25, %29 : vector<1x128xf32>
    %c0_18 = arith.constant 0 : index
    %c0_19 = arith.constant 0 : index
    %31 = vector.load %arg10[%c0_18, %c0_19] : memref<1x128xf32, #tpu.memory_space<vmem>>, vector<1x128xf32>
    tpu.vector_store %arg10[%c0_18, %c0_19], %30 {strides = array<i32>} : memref<1x128xf32, #tpu.memory_space<vmem>>, vector<1x128xf32>,
    %c0_i32_20 = arith.constant 0 : i32
    %32 = arith.cmpi eq, %arg1, %c0_i32_20 : i32
    %33 = arith.extui %32 : i1 to i32
    %c0_i32_21 = arith.constant 0 : i32
    %34 = arith.cmpi ne, %33, %c0_i32_21 : i32
    scf.if %34 {
      %c0_22 = arith.constant 0 : index
      %c0_23 = arith.constant 0 : index
      %35 = vector.load %arg4[%c0_22, %c0_23] : memref<1x128xf32, #tpu.memory_space<vmem>>, vector<1x128xf32>
      %c0_24 = arith.constant 0 : index
      %c0_25 = arith.constant 0 : index
      %36 = vector.load %arg9[%c0_24, %c0_25] : memref<1x128xf32, #tpu.memory_space<vmem>>, vector<1x128xf32>
      %cst_26 = arith.constant 2.000000e+00 : f32
      %37 = vector.broadcast %cst_26 : f32 to vector<1x128xf32>
      %38 = arith.mulf %37, %36 : vector<1x128xf32>
      %39 = arith.addf %38, %35 : vector<1x128xf32>
      %cst_27 = arith.constant 9.99999996E-13 : f32
      %40 = vector.broadcast %cst_27 : f32 to vector<1x128xf32>
      %41 = arith.maximumf %39, %40 : vector<1x128xf32>
      %c0_28 = arith.constant 0 : index
      %c0_29 = arith.constant 0 : index
      %42 = vector.load %arg10[%c0_28, %c0_29] : memref<1x128xf32, #tpu.memory_space<vmem>>, vector<1x128xf32>
      %cst_30 = arith.constant 2.000000e+00 : f32
      %43 = vector.broadcast %cst_30 : f32 to vector<1x128xf32>
      %44 = arith.mulf %43, %42 : vector<1x128xf32>
      %45 = arith.addf %44, %35 : vector<1x128xf32>
      %cst_31 = arith.constant 9.99999996E-13 : f32
      %46 = vector.broadcast %cst_31 : f32 to vector<1x128xf32>
      %47 = arith.maximumf %45, %46 : vector<1x128xf32>
      %48 = math.sqrt %41 : vector<1x128xf32>
      %49 = math.sqrt %47 : vector<1x128xf32>
      %50 = arith.subf %48, %49 : vector<1x128xf32>
      %cst_32 = arith.constant 1.000000e+00 : f32
      %51 = vector.broadcast %cst_32 : f32 to vector<1x128xf32>
      %52 = arith.addf %50, %51 : vector<1x128xf32>
      %cst_33 = arith.constant 0.000000e+00 : f32
      %53 = vector.broadcast %cst_33 : f32 to vector<1x128xf32>
      %54 = arith.maximumf %52, %53 : vector<1x128xf32>
      %c0_34 = arith.constant 0 : index
      %c0_35 = arith.constant 0 : index
      %55 = vector.load %arg8[%c0_34, %c0_35] : memref<1x128xf32, #tpu.memory_space<vmem>>, vector<1x128xf32>
      tpu.vector_store %arg8[%c0_34, %c0_35], %54 {strides = array<i32>} : memref<1x128xf32, #tpu.memory_space<vmem>>, vector<1x128xf32>,
    } else {
    }
    return
  }
  func.func @transform_0(%arg0: i32, %arg1: i32) -> (i32, i32) {
    %c0_i32 = arith.constant 0 : i32
    %c0_i32_0 = arith.constant 0 : i32
    return %c0_i32, %arg0 : i32, i32
  }
  func.func @transform_1(%arg0: i32, %arg1: i32) -> (i32, i32) {
    %c0_i32 = arith.constant 0 : i32
    %c0_i32_0 = arith.constant 0 : i32
    return %arg1, %c0_i32 : i32, i32
  }
  func.func @transform_2(%arg0: i32, %arg1: i32) -> (i32, i32) {
    %c0_i32 = arith.constant 0 : i32
    %c0_i32_0 = arith.constant 0 : i32
    return %c0_i32, %arg0 : i32, i32
  }
  func.func @transform_3(%arg0: i32, %arg1: i32) -> (i32, i32) {
    %c0_i32 = arith.constant 0 : i32
    %c0_i32_0 = arith.constant 0 : i32
    %c0_i32_1 = arith.constant 0 : i32
    return %c0_i32, %c0_i32_0 : i32, i32
  }
  func.func @transform_4(%arg0: i32, %arg1: i32) -> (i32, i32) {
    %c0_i32 = arith.constant 0 : i32
    %c0_i32_0 = arith.constant 0 : i32
    return %c0_i32, %arg0 : i32, i32
  }
  func.func @transform_5(%arg0: i32, %arg1: i32) -> (i32, i32) {
    %c0_i32 = arith.constant 0 : i32
    %c0_i32_0 = arith.constant 0 : i32
    %c0_i32_1 = arith.constant 0 : i32
    return %c0_i32, %c0_i32_0 : i32, i32
  }
  func.func @transform_6(%arg0: i32, %arg1: i32) -> (i32, i32) {
    %c0_i32 = arith.constant 0 : i32
    %c0_i32_0 = arith.constant 0 : i32
    return %c0_i32, %arg0 : i32, i32
  }
}

</mosaic_0001>

<llo_original>
// kernel: tpu_custom_call.1
$region0: #{tpu_custom_call.1}
  #allocation0 [shape = 'u32[]', space=smem, size = 0x4, offset = 0x4, fixed_abs, tag = 'smem constant byte address 0x4 - core index']
  #allocation1 [shape = 'u32[144,128]{1,0:T(1,128)}', space=vmem, size = 0x12000, scoped, tag = 'internal scratch']
  #allocation2 [shape = 'f32[1,128]{1,0:T(1,128)}', space=vmem, size = 0x200, scoped, tag = 'scratch operand']
  #allocation3 [shape = 'f32[1,128]{1,0:T(1,128)}', space=vmem, size = 0x200, scoped, tag = 'scratch operand']
  %s0 = inlined_call_operand.vmem [shape: f32[128,128], index: 0, kind: input, shape index: {}]
  %s1 = inlined_call_operand.vmem [shape: f32[128,128], index: 1, kind: input, shape index: {}]
  %s2 = inlined_call_operand.vmem [shape: f32[1,128], index: 2, kind: input, shape index: {}]
  %s3 = inlined_call_operand.vmem [shape: f32[128,1], index: 3, kind: input, shape index: {}]
  %s4 = inlined_call_operand.vmem [shape: s32[1,128], index: 4, kind: input, shape index: {}]
  %s5 = inlined_call_operand.vmem [shape: s32[128,1], index: 5, kind: input, shape index: {}]
  %s6 = inlined_call_operand.hbm [shape: f32[1,128], index: 6, kind: output, shape index: {}]
  %s7 = sld [smem:[#allocation0]]
  $region42: #{tpu_custom_call.1} parent=0
    _
  %s9 = ssub.s32 1, %s7
  %s10 = scalar_select 0, %s9, %s7
  $region1: #{tpu_custom_call.1} parent=0
    #allocation4 [shape = 'u8[512]{0}', space=vmem, size = 0x400, scoped, tag = 'output window, operand 0, single buffered']
    #allocation5 [shape = 's32[1]{0}', space=sflag, size = 0x4, scoped, tag = 'scoped memory for tpu_custom_call.1']
    %11 = vsyncpa [#allocation5], 0
    // Predicated region
    $region2: #{tpu_custom_call.1} parent=1 // pred_check
      _
    $region3: #{tpu_custom_call.1} parent=1 // pred_check_branch
      %13 = sbr.rel (0) target = $region5
    $region4: #{tpu_custom_call.1} parent=1 // pred_region
      _
    $region5: #{tpu_custom_call.1} parent=1 // pred_fallthru
      _
    // Predicated region
    $region6: #{tpu_custom_call.1} parent=1 // pred_check
      _
    $region7: #{tpu_custom_call.1} parent=1 // pred_check_branch
      %15 = sbr.rel (0) target = $region9
    $region8: #{tpu_custom_call.1} parent=1 // pred_region
      _
    $region9: #{tpu_custom_call.1} parent=1 // pred_fallthru
      _
    // Predicated region
    $region10: #{tpu_custom_call.1} parent=1 // pred_check
      _
    $region11: #{tpu_custom_call.1} parent=1 // pred_check_branch
      %17 = sbr.rel (0) target = $region13
    $region12: #{tpu_custom_call.1} parent=1 // pred_region
      _
    $region13: #{tpu_custom_call.1} parent=1 // pred_fallthru
      _
    // Predicated region
    $region14: #{tpu_custom_call.1} parent=1 // pred_check
      _
    $region15: #{tpu_custom_call.1} parent=1 // pred_check_branch
      %19 = sbr.rel (0) target = $region17
    $region16: #{tpu_custom_call.1} parent=1 // pred_region
      _
    $region17: #{tpu_custom_call.1} parent=1 // pred_fallthru
      _
    // Predicated region
    $region18: #{tpu_custom_call.1} parent=1 // pred_check
      _
    $region19: #{tpu_custom_call.1} parent=1 // pred_check_branch
      %21 = sbr.rel (0) target = $region21
    $region20: #{tpu_custom_call.1} parent=1 // pred_region
      _
    $region21: #{tpu_custom_call.1} parent=1 // pred_fallthru
      _
    // Predicated region
    $region22: #{tpu_custom_call.1} parent=1 // pred_check
      _
    $region23: #{tpu_custom_call.1} parent=1 // pred_check_branch
      %23 = sbr.rel (0) target = $region25
    $region24: #{tpu_custom_call.1} parent=1 // pred_region
      _
    $region25: #{tpu_custom_call.1} parent=1 // pred_fallthru
      _
    %p24 = scmp.eq.s32.totalorder 0, 0
    // Predicated region
    $region26: #{tpu_custom_call.1} parent=1 // pred_check
      %p25 = pneg %p24
    $region27: #{tpu_custom_call.1} parent=1 // pred_check_branch
      %27 = sbr.rel (%p25) target = $region29
    $region28: #{tpu_custom_call.1} parent=1 // pred_region
      %28 = vst [vmem:[#allocation2] sm:$0x1] -inf
      %29 = vst [vmem:[#allocation3] sm:$0x1] inf
    $region29: #{tpu_custom_call.1} parent=1 // pred_fallthru
      _
    %v30 = vld [vmem:[%s1] sm:$0xff]
    %v31 = vld [vmem:[%s1 + $0x8] sm:$0xff]
    %v32 = vld [vmem:[%s1 + $0x10] sm:$0xff]
    %v33 = vld [vmem:[%s1 + $0x18] sm:$0xff]
    %v34 = vld [vmem:[%s1 + $0x20] sm:$0xff]
    %v35 = vld [vmem:[%s1 + $0x28] sm:$0xff]
    %v36 = vld [vmem:[%s1 + $0x30] sm:$0xff]
    %v37 = vld [vmem:[%s1 + $0x38] sm:$0xff]
    %v38 = vld [vmem:[%s1 + $0x40] sm:$0xff]
    %v39 = vld [vmem:[%s1 + $0x48] sm:$0xff]
    %v40 = vld [vmem:[%s1 + $0x50] sm:$0xff]
    %v41 = vld [vmem:[%s1 + $0x58] sm:$0xff]
    %v42 = vld [vmem:[%s1 + $0x60] sm:$0xff]
    %v43 = vld [vmem:[%s1 + $0x68] sm:$0xff]
    %v44 = vld [vmem:[%s1 + $0x70] sm:$0xff]
    %v45 = vld [vmem:[%s1 + $0x78] sm:$0xff]
    %v46 = vld [vmem:[%s0] sm:$0xff]
    %v47 = vld [vmem:[%s0 + $0x8] sm:$0xff]
    %v48 = vld [vmem:[%s0 + $0x10] sm:$0xff]
    %v49 = vld [vmem:[%s0 + $0x18] sm:$0xff]
    %v50 = vld [vmem:[%s0 + $0x20] sm:$0xff]
    %v51 = vld [vmem:[%s0 + $0x28] sm:$0xff]
    %v52 = vld [vmem:[%s0 + $0x30] sm:$0xff]
    %v53 = vld [vmem:[%s0 + $0x38] sm:$0xff]
    %v54 = vld [vmem:[%s0 + $0x40] sm:$0xff]
    %v55 = vld [vmem:[%s0 + $0x48] sm:$0xff]
    %v56 = vld [vmem:[%s0 + $0x50] sm:$0xff]
    %v57 = vld [vmem:[%s0 + $0x58] sm:$0xff]
    %v58 = vld [vmem:[%s0 + $0x60] sm:$0xff]
    %v59 = vld [vmem:[%s0 + $0x68] sm:$0xff]
    %v60 = vld [vmem:[%s0 + $0x70] sm:$0xff]
    %v61 = vld [vmem:[%s0 + $0x78] sm:$0xff]
    %62 = vmatprep.subr.mxu0 0.0
    %63 = vmatpush1.msra.mxu0 %v61
    %64 = vmatprep.subr.mxu0 0.0
    %65 = vmatpush1.msra.mxu0 %v60
    %66 = vmatprep.subr.mxu0 0.0
    %67 = vmatpush1.msra.mxu0 %v59
    %68 = vmatprep.subr.mxu0 0.0
    %69 = vmatpush1.msra.mxu0 %v58
    %70 = vmatprep.subr.mxu0 0.0
    %71 = vmatpush1.msra.mxu0 %v57
    %72 = vmatprep.subr.mxu0 0.0
    %73 = vmatpush1.msra.mxu0 %v56
    %74 = vmatprep.subr.mxu0 0.0
    %75 = vmatpush1.msra.mxu0 %v55
    %76 = vmatprep.subr.mxu0 0.0
    %77 = vmatpush1.msra.mxu0 %v54
    %78 = vmatprep.subr.mxu0 0.0
    %79 = vmatpush1.msra.mxu0 %v53
    %80 = vmatprep.subr.mxu0 0.0
    %81 = vmatpush1.msra.mxu0 %v52
    %82 = vmatprep.subr.mxu0 0.0
    %83 = vmatpush1.msra.mxu0 %v51
    %84 = vmatprep.subr.mxu0 0.0
    %85 = vmatpush1.msra.mxu0 %v50
    %86 = vmatprep.subr.mxu0 0.0
    %87 = vmatpush1.msra.mxu0 %v49
    %88 = vmatprep.subr.mxu0 0.0
    %89 = vmatpush1.msra.mxu0 %v48
    %90 = vmatprep.subr.mxu0 0.0
    %91 = vmatpush1.msra.mxu0 %v47
    %92 = vmatprep.subr.mxu0 0.0
    %93 = vmatpush1.msra.mxu0 %v46
    %94 = vmatprep.subr.mxu0 0.0
    %95 = vmatpush2.msra.mxu0 0.0
    %96 = vmatprep.subr.mxu0 0.0
    %97 = vmatpush2.msra.mxu0 0.0
    %98 = vmatprep.subr.mxu0 0.0
    %99 = vmatpush2.msra.mxu0 0.0
    %100 = vmatprep.subr.mxu0 0.0
    %101 = vmatpush2.msra.mxu0 0.0
    %102 = vmatprep.subr.mxu0 0.0
    %103 = vmatpush2.msra.mxu0 0.0
    %104 = vmatprep.subr.mxu0 0.0
    %105 = vmatpush2.msra.mxu0 0.0
    %106 = vmatprep.subr.mxu0 0.0
    %107 = vmatpush2.msra.mxu0 0.0
    %108 = vmatprep.subr.mxu0 0.0
    %109 = vmatpush2.msra.mxu0 0.0
    %110 = vmatprep.subr.mxu0 0.0
    %111 = vmatpush2.msra.mxu0 0.0
    %112 = vmatprep.subr.mxu0 0.0
    %113 = vmatpush2.msra.mxu0 0.0
    %114 = vmatprep.subr.mxu0 0.0
    %115 = vmatpush2.msra.mxu0 0.0
    %116 = vmatprep.subr.mxu0 0.0
    %117 = vmatpush2.msra.mxu0 0.0
    %118 = vmatprep.subr.mxu0 0.0
    %119 = vmatpush2.msra.mxu0 0.0
    %120 = vmatprep.subr.mxu0 0.0
    %121 = vmatpush2.msra.mxu0 0.0
    %122 = vmatprep.subr.mxu0 0.0
    %123 = vmatpush2.msra.mxu0 0.0
    %124 = vmatprep.subr.mxu0 0.0
    %125 = vmatpush2.msra.mxu0 0.0
    %126 = vmatprep.mubr.f32.mxu0 0.0
    %127 = vmatmul.mubr.f32.gmra.mxu0 %v30
    %v128 = vpop.f32.mrf.mxu0
    %v129 = vadd.f32 0.0, %v128
    %v130 = vpop.f32.mrf.mxu0
    %131 = vmatprep.mubr.f32.mxu0 0.0
    %132 = vmatmul.mubr.f32.gmra.mxu0 %v31
    %v133 = vpop.f32.mrf.mxu0
    %v134 = vadd.f32 0.0, %v133
    %v135 = vpop.f32.mrf.mxu0
    %136 = vmatprep.mubr.f32.mxu0 0.0
    %137 = vmatmul.mubr.f32.gmra.mxu0 %v32
    %v138 = vpop.f32.mrf.mxu0
    %v139 = vadd.f32 0.0, %v138
    %v140 = vpop.f32.mrf.mxu0
    %141 = vmatprep.mubr.f32.mxu0 0.0
    %142 = vmatmul.mubr.f32.gmra.mxu0 %v33
    %v143 = vpop.f32.mrf.mxu0
    %v144 = vadd.f32 0.0, %v143
    %v145 = vpop.f32.mrf.mxu0
    %146 = vmatprep.mubr.f32.mxu0 0.0
    %147 = vmatmul.mubr.f32.gmra.mxu0 %v34
    %v148 = vpop.f32.mrf.mxu0
    %v149 = vadd.f32 0.0, %v148
    %v150 = vpop.f32.mrf.mxu0
    %151 = vmatprep.mubr.f32.mxu0 0.0
    %152 = vmatmul.mubr.f32.gmra.mxu0 %v35
    %v153 = vpop.f32.mrf.mxu0
    %v154 = vadd.f32 0.0, %v153
    %v155 = vpop.f32.mrf.mxu0
    %156 = vmatprep.mubr.f32.mxu0 0.0
    %157 = vmatmul.mubr.f32.gmra.mxu0 %v36
    %v158 = vpop.f32.mrf.mxu0
    %v159 = vadd.f32 0.0, %v158
    %v160 = vpop.f32.mrf.mxu0
    %161 = vmatprep.mubr.f32.mxu0 0.0
    %162 = vmatmul.mubr.f32.gmra.mxu0 %v37
    %v163 = vpop.f32.mrf.mxu0
    %v164 = vadd.f32 0.0, %v163
    %v165 = vpop.f32.mrf.mxu0
    %166 = vmatprep.mubr.f32.mxu0 0.0
    %167 = vmatmul.mubr.f32.gmra.mxu0 %v38
    %v168 = vpop.f32.mrf.mxu0
    %v169 = vadd.f32 0.0, %v168
    %v170 = vpop.f32.mrf.mxu0
    %171 = vmatprep.mubr.f32.mxu0 0.0
    %172 = vmatmul.mubr.f32.gmra.mxu0 %v39
    %v173 = vpop.f32.mrf.mxu0
    %v174 = vadd.f32 0.0, %v173
    %v175 = vpop.f32.mrf.mxu0
    %176 = vmatprep.mubr.f32.mxu0 0.0
    %177 = vmatmul.mubr.f32.gmra.mxu0 %v40
    %v178 = vpop.f32.mrf.mxu0
    %v179 = vadd.f32 0.0, %v178
    %v180 = vpop.f32.mrf.mxu0
    %181 = vmatprep.mubr.f32.mxu0 0.0
    %182 = vmatmul.mubr.f32.gmra.mxu0 %v41
    %v183 = vpop.f32.mrf.mxu0
    %v184 = vadd.f32 0.0, %v183
    %v185 = vpop.f32.mrf.mxu0
    %186 = vmatprep.mubr.f32.mxu0 0.0
    %187 = vmatmul.mubr.f32.gmra.mxu0 %v42
    %v188 = vpop.f32.mrf.mxu0
    %v189 = vadd.f32 0.0, %v188
    %v190 = vpop.f32.mrf.mxu0
    %191 = vmatprep.mubr.f32.mxu0 0.0
    %192 = vmatmul.mubr.f32.gmra.mxu0 %v43
    %v193 = vpop.f32.mrf.mxu0
    %v194 = vadd.f32 0.0, %v193
    %v195 = vpop.f32.mrf.mxu0
    %196 = vmatprep.mubr.f32.mxu0 0.0
    %197 = vmatmul.mubr.f32.gmra.mxu0 %v44
    %v198 = vpop.f32.mrf.mxu0
    %v199 = vadd.f32 0.0, %v198
    %v200 = vpop.f32.mrf.mxu0
    %201 = vmatprep.mubr.f32.mxu0 0.0
    %202 = vmatmul.mubr.f32.gmra.mxu0 %v45
    %v203 = vpop.f32.mrf.mxu0
    %v204 = vadd.f32 0.0, %v203
    %v205 = vpop.f32.mrf.mxu0
    %206 = vdwg.mxu0
    %s207 = smul.u32 0, 128
    %s208 = scalar_lea.vmem %s3, %s207
    %v209 = vld [vmem:[%s208] sm:$0xff]
    %v210 = vld [vmem:[%s208 + $0x8] sm:$0xff]
    %v211 = vld [vmem:[%s208 + $0x10] sm:$0xff]
    %v212 = vld [vmem:[%s208 + $0x18] sm:$0xff]
    %v213 = vld [vmem:[%s208 + $0x20] sm:$0xff]
    %v214 = vld [vmem:[%s208 + $0x28] sm:$0xff]
    %v215 = vld [vmem:[%s208 + $0x30] sm:$0xff]
    %v216 = vld [vmem:[%s208 + $0x38] sm:$0xff]
    %v217 = vld [vmem:[%s208 + $0x40] sm:$0xff]
    %v218 = vld [vmem:[%s208 + $0x48] sm:$0xff]
    %v219 = vld [vmem:[%s208 + $0x50] sm:$0xff]
    %v220 = vld [vmem:[%s208 + $0x58] sm:$0xff]
    %v221 = vld [vmem:[%s208 + $0x60] sm:$0xff]
    %v222 = vld [vmem:[%s208 + $0x68] sm:$0xff]
    %v223 = vld [vmem:[%s208 + $0x70] sm:$0xff]
    %v224 = vld [vmem:[%s208 + $0x78] sm:$0xff]
    %s225 = scalar_lea.vmem %s5, %s207
    %v226 = vld [vmem:[%s225] sm:$0xff]
    %v227 = vld [vmem:[%s225 + $0x8] sm:$0xff]
    %v228 = vld [vmem:[%s225 + $0x10] sm:$0xff]
    %v229 = vld [vmem:[%s225 + $0x18] sm:$0xff]
    %v230 = vld [vmem:[%s225 + $0x20] sm:$0xff]
    %v231 = vld [vmem:[%s225 + $0x28] sm:$0xff]
    %v232 = vld [vmem:[%s225 + $0x30] sm:$0xff]
    %v233 = vld [vmem:[%s225 + $0x38] sm:$0xff]
    %v234 = vld [vmem:[%s225 + $0x40] sm:$0xff]
    %v235 = vld [vmem:[%s225 + $0x48] sm:$0xff]
    %v236 = vld [vmem:[%s225 + $0x50] sm:$0xff]
    %v237 = vld [vmem:[%s225 + $0x58] sm:$0xff]
    %v238 = vld [vmem:[%s225 + $0x60] sm:$0xff]
    %v239 = vld [vmem:[%s225 + $0x68] sm:$0xff]
    %v240 = vld [vmem:[%s225 + $0x70] sm:$0xff]
    %v241 = vld [vmem:[%s225 + $0x78] sm:$0xff]
    %243 = vset.pattern.permute.xlu0 0
    %244 = vperm.xlu0 %243, %v209
    %v245 = vpop.permute.xlu0 %244
    %248 = vset.pattern.permute.xlu0 0
    %249 = vperm.xlu0 %248, %v210
    %v250 = vpop.permute.xlu0 %249
    %253 = vset.pattern.permute.xlu0 0
    %254 = vperm.xlu0 %253, %v211
    %v255 = vpop.permute.xlu0 %254
    %258 = vset.pattern.permute.xlu0 0
    %259 = vperm.xlu0 %258, %v212
    %v260 = vpop.permute.xlu0 %259
    %263 = vset.pattern.permute.xlu0 0
    %264 = vperm.xlu0 %263, %v213
    %v265 = vpop.permute.xlu0 %264
    %268 = vset.pattern.permute.xlu0 0
    %269 = vperm.xlu0 %268, %v214
    %v270 = vpop.permute.xlu0 %269
    %273 = vset.pattern.permute.xlu0 0
    %274 = vperm.xlu0 %273, %v215
    %v275 = vpop.permute.xlu0 %274
    %278 = vset.pattern.permute.xlu0 0
    %279 = vperm.xlu0 %278, %v216
    %v280 = vpop.permute.xlu0 %279
    %283 = vset.pattern.permute.xlu0 0
    %284 = vperm.xlu0 %283, %v217
    %v285 = vpop.permute.xlu0 %284
    %288 = vset.pattern.permute.xlu0 0
    %289 = vperm.xlu0 %288, %v218
    %v290 = vpop.permute.xlu0 %289
    %293 = vset.pattern.permute.xlu0 0
    %294 = vperm.xlu0 %293, %v219
    %v295 = vpop.permute.xlu0 %294
    %298 = vset.pattern.permute.xlu0 0
    %299 = vperm.xlu0 %298, %v220
    %v300 = vpop.permute.xlu0 %299
    %303 = vset.pattern.permute.xlu0 0
    %304 = vperm.xlu0 %303, %v221
    %v305 = vpop.permute.xlu0 %304
    %308 = vset.pattern.permute.xlu0 0
    %309 = vperm.xlu0 %308, %v222
    %v310 = vpop.permute.xlu0 %309
    %313 = vset.pattern.permute.xlu0 0
    %314 = vperm.xlu0 %313, %v223
    %v315 = vpop.permute.xlu0 %314
    %318 = vset.pattern.permute.xlu0 0
    %319 = vperm.xlu0 %318, %v224
    %v320 = vpop.permute.xlu0 %319
    %v322 = vsub.f32 %v245, %v129
    %v323 = vsub.f32 %v250, %v134
    %v324 = vsub.f32 %v255, %v139
    %v325 = vsub.f32 %v260, %v144
    %v326 = vsub.f32 %v265, %v149
    %v327 = vsub.f32 %v270, %v154
    %v328 = vsub.f32 %v275, %v159
    %v329 = vsub.f32 %v280, %v164
    %v330 = vsub.f32 %v285, %v169
    %v331 = vsub.f32 %v290, %v174
    %v332 = vsub.f32 %v295, %v179
    %v333 = vsub.f32 %v300, %v184
    %v334 = vsub.f32 %v305, %v189
    %v335 = vsub.f32 %v310, %v194
    %v336 = vsub.f32 %v315, %v199
    %v337 = vsub.f32 %v320, %v204
    %v338 = vld [vmem:[%s4] sm:$0x1]
    %339 = vset.pattern.permute.xlu0 0
    %340 = vperm.xlu0 %339, %v226
    %v341 = vpop.permute.xlu0 %340
    %342 = vset.pattern.permute.xlu0 0
    %343 = vperm.xlu0 %342, %v227
    %v344 = vpop.permute.xlu0 %343
    %345 = vset.pattern.permute.xlu0 0
    %346 = vperm.xlu0 %345, %v228
    %v347 = vpop.permute.xlu0 %346
    %348 = vset.pattern.permute.xlu0 0
    %349 = vperm.xlu0 %348, %v229
    %v350 = vpop.permute.xlu0 %349
    %351 = vset.pattern.permute.xlu0 0
    %352 = vperm.xlu0 %351, %v230
    %v353 = vpop.permute.xlu0 %352
    %354 = vset.pattern.permute.xlu0 0
    %355 = vperm.xlu0 %354, %v231
    %v356 = vpop.permute.xlu0 %355
    %357 = vset.pattern.permute.xlu0 0
    %358 = vperm.xlu0 %357, %v232
    %v359 = vpop.permute.xlu0 %358
    %360 = vset.pattern.permute.xlu0 0
    %361 = vperm.xlu0 %360, %v233
    %v362 = vpop.permute.xlu0 %361
    %363 = vset.pattern.permute.xlu0 0
    %364 = vperm.xlu0 %363, %v234
    %v365 = vpop.permute.xlu0 %364
    %366 = vset.pattern.permute.xlu0 0
    %367 = vperm.xlu0 %366, %v235
    %v368 = vpop.permute.xlu0 %367
    %369 = vset.pattern.permute.xlu0 0
    %370 = vperm.xlu0 %369, %v236
    %v371 = vpop.permute.xlu0 %370
    %372 = vset.pattern.permute.xlu0 0
    %373 = vperm.xlu0 %372, %v237
    %v374 = vpop.permute.xlu0 %373
    %375 = vset.pattern.permute.xlu0 0
    %376 = vperm.xlu0 %375, %v238
    %v377 = vpop.permute.xlu0 %376
    %378 = vset.pattern.permute.xlu0 0
    %379 = vperm.xlu0 %378, %v239
    %v380 = vpop.permute.xlu0 %379
    %381 = vset.pattern.permute.xlu0 0
    %382 = vperm.xlu0 %381, %v240
    %v383 = vpop.permute.xlu0 %382
    %384 = vset.pattern.permute.xlu0 0
    %385 = vperm.xlu0 %384, %v241
    %v386 = vpop.permute.xlu0 %385
    %v387 = vlaneseq
    %v388 = vshrl.u32 %v387, 7
    %v389 = vsub.s32 0, %v388
    %v390 = vrot.slane %v338, %v389
    %vm391 = vcmp.eq.s32.totalorder %v341, %v390
    %vm392 = vcmp.eq.s32.totalorder %v344, %v390
    %vm393 = vcmp.eq.s32.totalorder %v347, %v390
    %vm394 = vcmp.eq.s32.totalorder %v350, %v390
    %vm395 = vcmp.eq.s32.totalorder %v353, %v390
    %vm396 = vcmp.eq.s32.totalorder %v356, %v390
    %vm397 = vcmp.eq.s32.totalorder %v359, %v390
    %vm398 = vcmp.eq.s32.totalorder %v362, %v390
    %vm399 = vcmp.eq.s32.totalorder %v365, %v390
    %vm400 = vcmp.eq.s32.totalorder %v368, %v390
    %vm401 = vcmp.eq.s32.totalorder %v371, %v390
    %vm402 = vcmp.eq.s32.totalorder %v374, %v390
    %vm403 = vcmp.eq.s32.totalorder %v377, %v390
    %vm404 = vcmp.eq.s32.totalorder %v380, %v390
    %vm405 = vcmp.eq.s32.totalorder %v383, %v390
    %vm406 = vcmp.eq.s32.totalorder %v386, %v390
    %v407 = vld [vmem:[#allocation2] sm:$0x1]
    %v408 = vsel %vm391, %v322, -inf
    %v409 = vsel %vm392, %v323, -inf
    %v410 = vsel %vm393, %v324, -inf
    %v411 = vsel %vm394, %v325, -inf
    %v412 = vsel %vm395, %v326, -inf
    %v413 = vsel %vm396, %v327, -inf
    %v414 = vsel %vm397, %v328, -inf
    %v415 = vsel %vm398, %v329, -inf
    %v416 = vsel %vm399, %v330, -inf
    %v417 = vsel %vm400, %v331, -inf
    %v418 = vsel %vm401, %v332, -inf
    %v419 = vsel %vm402, %v333, -inf
    %v420 = vsel %vm403, %v334, -inf
    %v421 = vsel %vm404, %v335, -inf
    %v422 = vsel %vm405, %v336, -inf
    %v423 = vsel %vm406, %v337, -inf
    %v424 = vmax.f32 %v408, %v412
    %v425 = vmax.f32 %v409, %v413
    %v426 = vmax.f32 %v410, %v414
    %v427 = vmax.f32 %v411, %v415
    %v428 = vmax.f32 %v424, %v416
    %v429 = vmax.f32 %v425, %v417
    %v430 = vmax.f32 %v426, %v418
    %v431 = vmax.f32 %v427, %v419
    %v432 = vmax.f32 %v428, %v420
    %v433 = vmax.f32 %v429, %v421
    %v434 = vmax.f32 %v430, %v422
    %v435 = vmax.f32 %v431, %v423
    %v436 = vmax.f32 %v432, %v433
    %v437 = vmax.f32 %v434, %v435
    %v438 = vmax.f32 %v436, %v437
    %v439 = vrot.slane %v438, 4
    %v440 = vmax.f32 %v438, %v439
    %v441 = vrot.slane %v440, 2
    %v442 = vmax.f32 %v440, %v441
    %v443 = vrot.slane %v442, 1
    %v444 = vmax.f32 %v442, %v443
    %v445 = vmax.f32 %v407, %v444
    %446 = vst [vmem:[#allocation2] sm:$0x1] %v445
    %v447 = vld [vmem:[#allocation3] sm:$0x1]
    %v448 = vsel %vm391, inf, %v322
    %v449 = vsel %vm392, inf, %v323
    %v450 = vsel %vm393, inf, %v324
    %v451 = vsel %vm394, inf, %v325
    %v452 = vsel %vm395, inf, %v326
    %v453 = vsel %vm396, inf, %v327
    %v454 = vsel %vm397, inf, %v328
    %v455 = vsel %vm398, inf, %v329
    %v456 = vsel %vm399, inf, %v330
    %v457 = vsel %vm400, inf, %v331
    %v458 = vsel %vm401, inf, %v332
    %v459 = vsel %vm402, inf, %v333
    %v460 = vsel %vm403, inf, %v334
    %v461 = vsel %vm404, inf, %v335
    %v462 = vsel %vm405, inf, %v336
    %v463 = vsel %vm406, inf, %v337
    %v464 = vmin.f32 %v448, %v452
    %v465 = vmin.f32 %v449, %v453
    %v466 = vmin.f32 %v450, %v454
    %v467 = vmin.f32 %v451, %v455
    %v468 = vmin.f32 %v464, %v456
    %v469 = vmin.f32 %v465, %v457
    %v470 = vmin.f32 %v466, %v458
    %v471 = vmin.f32 %v467, %v459
    %v472 = vmin.f32 %v468, %v460
    %v473 = vmin.f32 %v469, %v461
    %v474 = vmin.f32 %v470, %v462
    %v475 = vmin.f32 %v471, %v463
    %v476 = vmin.f32 %v472, %v473
    %v477 = vmin.f32 %v474, %v475
    %v478 = vmin.f32 %v476, %v477
    %v479 = vrot.slane %v478, 4
    %v480 = vmin.f32 %v478, %v479
    %v481 = vrot.slane %v480, 2
    %v482 = vmin.f32 %v480, %v481
    %v483 = vrot.slane %v482, 1
    %v484 = vmin.f32 %v482, %v483
    %v485 = vmin.f32 %v447, %v484
    %486 = vst [vmem:[#allocation3] sm:$0x1] %v485
    // Predicated region
    $region30: #{tpu_custom_call.1} parent=1 // pred_check
      %p487 = pneg %p24
    $region31: #{tpu_custom_call.1} parent=1 // pred_check_branch
      %489 = sbr.rel (%p487) target = $region33
    $region32: #{tpu_custom_call.1} parent=1 // pred_region
      %v490 = vld [vmem:[%s2] sm:$0x1]
      %v491 = vld [vmem:[#allocation2] sm:$0x1]
      %v492 = vmul.f32 %v491, 2.0
      %v493 = vadd.f32 %v492, %v490
      %v494 = vmax.f32 %v493, 1e-12
      %v495 = vld [vmem:[#allocation3] sm:$0x1]
      %v496 = vmul.f32 %v495, 2.0
      %v497 = vadd.f32 %v496, %v490
      %v498 = vmax.f32 %v497, 1e-12
      %v499 = vrsqrt.pop %v494
      %v500 = vmul.f32 %v494, %v499
      %vm501 = vcmp.eq.f32.partialorder %v494, inf
      %v502 = vsel %vm501, %v494, %v500
      %vm503 = vcmp.eq.f32.partialorder %v494, 0.0
      %v504 = vand.u32 %v494, 2147483648
      %v505 = vsel %vm503, %v504, %v502
      %v506 = vrsqrt.pop %v498
      %v507 = vmul.f32 %v498, %v506
      %vm508 = vcmp.eq.f32.partialorder %v498, inf
      %v509 = vsel %vm508, %v498, %v507
      %vm510 = vcmp.eq.f32.partialorder %v498, 0.0
      %v511 = vand.u32 %v498, 2147483648
      %v512 = vsel %vm510, %v511, %v509
      %v513 = vsub.f32 %v505, %v512
      %v514 = vadd.f32 %v513, 1.0
      %v515 = vmax.f32 %v514, 0.0
      %516 = vst [vmem:[#allocation4] sm:$0x1] %v515
    $region33: #{tpu_custom_call.1} parent=1 // pred_fallthru
      _
    // Predicated region
    $region34: #{tpu_custom_call.1} parent=1 // pred_check
      _
    $region35: #{tpu_custom_call.1} parent=1 // pred_check_branch
      %518 = sbr.rel (0) target = $region37
    $region36: #{tpu_custom_call.1} parent=1 // pred_region
      %s520 = ssub.s32 16, 16
      %521 = vsyncadd [#allocation5], %s520
      %s523 = sshll.u32 [#allocation4], 4
      %s524 = int_to_ptr.vmem [resolvable:$true] %s523
      %526 = dma.vmem_to_hbm [thread:$0]  %s524, 16, %s6, [#allocation5]
    $region37: #{tpu_custom_call.1} parent=1 // pred_fallthru
      _
    // Predicated region
    $region38: #{tpu_custom_call.1} parent=1 // pred_check
      _
    $region39: #{tpu_custom_call.1} parent=1 // pred_check_branch
      %528 = sbr.rel (0) target = $region41
    $region40: #{tpu_custom_call.1} parent=1 // pred_region
      %529 = dma.done [#allocation5], 16
    $region41: #{tpu_custom_call.1} parent=1 // pred_fallthru
      _
    %530 = vsyncpa [#allocation5], 1

</llo_original>
